<compile_context>
chip_gen: v6e
topology: v6e:2x2x1
jax: 0.10.0
libtpu: 0.0.40
codegen_flags: <defaults>
</compile_context>

<pallas_src>
import jax
import jax.numpy as jnp
from jax.experimental import pallas as pl
from jax.experimental.pallas import tpu as pltpu

VOCAB = 30
EMBED = 1024
MAX_TOK_BLOCK = 512  # tokens per grid step for large inputs (2 MiB f32 output block)


def _embedding_kernel(ids_ref, table_ref, out_ref):
    # ids_ref   : (TB, 1) int32 in VMEM
    # table_ref : (VOCAB, EMBED) in VMEM, resident across the grid (constant index_map)
    # out_ref   : (TB, EMBED)
    tb = out_ref.shape[0]
    vocab = table_ref.shape[0]
    ids = ids_ref[...]                                            # (TB, 1)
    cols = jax.lax.broadcasted_iota(jnp.int32, (tb, vocab), 1)    # (TB, VOCAB)
    onehot = (cols == ids).astype(table_ref.dtype)                # exact 0/1
    out_ref[...] = jnp.dot(
        onehot, table_ref[...], preferred_element_type=jnp.float32
    ).astype(out_ref.dtype)


def _pick_tok_block(n):
    """Sublane-aligned token block: big for large inputs, >=2 grid steps when possible."""
    if n >= 2 * MAX_TOK_BLOCK:
        return MAX_TOK_BLOCK
    # Small input: split roughly in half (keeps both v7x TCs busy), round up to
    # a multiple of 8 (sublane alignment), and avoid over-padding tiny inputs.
    blk = max(8, ((pl.cdiv(n, 2) + 7) // 8) * 8)
    return min(blk, MAX_TOK_BLOCK)


def prot_embedding(x, table, *, tok_block=None):
    """x: (B, S) integer token ids; table: (VOCAB, EMBED). Returns (B, S, EMBED)."""
    B, S = x.shape
    V, E = table.shape
    n = B * S
    tb = tok_block if tok_block is not None else _pick_tok_block(n)
    n_pad = pl.cdiv(n, tb) * tb

    ids = x.reshape(n).astype(jnp.int32)
    if n_pad != n:
        # pad with id 0; padded rows are sliced off below (only in misaligned case)
        ids = jnp.pad(ids, (0, n_pad - n))
    ids_2d = ids.reshape(n_pad, 1)

    itemsize = jnp.dtype(table.dtype).itemsize
    cost = pl.CostEstimate(
        flops=2 * n_pad * V * E,
        transcendentals=0,
        bytes_accessed=n_pad * E * itemsize + n_pad * 4 + V * E * itemsize,
    )

    out_flat = pl.pallas_call(
        _embedding_kernel,
        out_shape=jax.ShapeDtypeStruct((n_pad, E), table.dtype),
        grid=(n_pad // tb,),
        in_specs=[
            pl.BlockSpec((tb, 1), lambda i: (i, 0)),
            pl.BlockSpec((V, E), lambda i: (0, 0)),   # constant block -> table stays resident
        ],
        out_specs=pl.BlockSpec((tb, E), lambda i: (i, 0)),
        compiler_params=pltpu.CompilerParams(
            dimension_semantics=("parallel",),
        ),
        cost_estimate=cost,
    )(ids_2d, table)

    if n_pad != n:
        out_flat = out_flat[:n]
    return out_flat.reshape(B, S, E)


def make_embedding_table(key):
    """Deterministic stand-in for nn.Embedding(30, 1024, padding_idx=0) weights."""
    w = jax.random.normal(key, (VOCAB, EMBED), dtype=jnp.float32)
    # padding_idx=0 -> row 0 zero-initialized (forward-pass behavior unaffected)
    w = w.at[0].set(0.0)
    return w


if __name__ == "__main__":
    key = jax.random.PRNGKey(0)
    k_tab, k_ids, k_ids2 = jax.random.split(key, 3)

    table = make_embedding_table(k_tab)

    # Small deterministic input consistent with the module: batch=2, seq=8.
    B, S = 2, 8
    x = jax.random.randint(k_ids, (B, S), minval=0, maxval=VOCAB, dtype=jnp.int32)
    out = jax.block_until_ready(prot_embedding(x, table))
    ref = jnp.take(table, x, axis=0)
    assert out.shape == (B, S, EMBED)
    assert jnp.allclose(out, ref), "mismatch vs reference gather (small case)"

    # Larger case exercising the big-block (512 tokens/step, 2 grid steps) path.
    B2, S2 = 4, 256
    x2 = jax.random.randint(k_ids2, (B2, S2), minval=0, maxval=VOCAB, dtype=jnp.int32)
    out2 = jax.block_until_ready(prot_embedding(x2, table))
    ref2 = jnp.take(table, x2, axis=0)
    assert out2.shape == (B2, S2, EMBED)
    assert jnp.allclose(out2, ref2), "mismatch vs reference gather (large case)"

    print("KERNEL_OK")
</pallas_src>

<mosaic_0001>
module attributes {stable_mosaic.version = 11 : i64} {
  func.func @_embedding_kernel(%arg0: i32, %arg1: memref<8x1xi32, #tpu.memory_space<vmem>>, %arg2: memref<30x1024xf32, #tpu.memory_space<vmem>>, %arg3: memref<8x1024xf32, #tpu.memory_space<vmem>>) attributes {dimension_semantics = [#tpu.dimension_semantics<parallel>], iteration_bounds = array<i64: 2>, scalar_prefetch = 0 : i64, scratch_operands = 0 : i64, tpu.core_type = #tpu.core_type<tc>, window_params = [{transform_indices = @transform_0, window_bounds = array<i64: 8, 1>}, {pipeline_mode = #tpu.pipeline_mode<synchronous>, transform_indices = @transform_1, window_bounds = array<i64: 30, 1024>}, {transform_indices = @transform_2, window_bounds = array<i64: 8, 1024>}]} {
    %c0 = arith.constant 0 : index
    %c0_0 = arith.constant 0 : index
    %0 = vector.load %arg1[%c0, %c0_0] : memref<8x1xi32, #tpu.memory_space<vmem>>, vector<8x1xi32>
    %1 = tpu.iota {dimensions = array<i32: 1>} : vector<8x30xi32>
    %2 = vector.broadcast %0 : vector<8x1xi32> to vector<8x30xi32>
    %3 = arith.cmpi eq, %1, %2 : vector<8x30xi32>
    %4 = arith.extui %3 : vector<8x30xi1> to vector<8x30xi32>
    %5 = arith.sitofp %4 : vector<8x30xi32> to vector<8x30xf32>
    %c0_1 = arith.constant 0 : index
    %c0_2 = arith.constant 0 : index
    %6 = vector.load %arg2[%c0_1, %c0_2] : memref<30x1024xf32, #tpu.memory_space<vmem>>, vector<30x1024xf32>
    %cst = arith.constant dense<0.000000e+00> : vector<8x1024xf32>
    %7 = tpu.matmul %5, %6, %cst {dimension_numbers = #tpu.dot_dimension_numbers<[1], [0], [0], [1], [0, 0, 1, 1], [], []>} : vector<8x30xf32>, vector<30x1024xf32>, vector<8x1024xf32> -> vector<8x1024xf32>
    %c0_3 = arith.constant 0 : index
    %c0_4 = arith.constant 0 : index
    %8 = vector.load %arg3[%c0_3, %c0_4] : memref<8x1024xf32, #tpu.memory_space<vmem>>, vector<8x1024xf32>
    tpu.vector_store %arg3[%c0_3, %c0_4], %7 {strides = array<i32>} : memref<8x1024xf32, #tpu.memory_space<vmem>>, vector<8x1024xf32>,
    return
  }
  func.func @transform_0(%arg0: i32) -> (i32, i32) {
    %c0_i32 = arith.constant 0 : i32
    %c0_i32_0 = arith.constant 0 : i32
    return %arg0, %c0_i32 : i32, i32
  }
  func.func @transform_1(%arg0: i32) -> (i32, i32) {
    %c0_i32 = arith.constant 0 : i32
    %c0_i32_0 = arith.constant 0 : i32
    %c0_i32_1 = arith.constant 0 : i32
    return %c0_i32, %c0_i32_0 : i32, i32
  }
  func.func @transform_2(%arg0: i32) -> (i32, i32) {
    %c0_i32 = arith.constant 0 : i32
    %c0_i32_0 = arith.constant 0 : i32
    return %arg0, %c0_i32 : i32, i32
  }
}

</mosaic_0001>

<llo_original>
// kernel: tpu_custom_call.1
$region0: #{tpu_custom_call.1}
  #allocation0 [shape = 'u32[]', space=smem, size = 0x4, offset = 0x4, fixed_abs, tag = 'smem constant byte address 0x4 - core index']
  #allocation1 [shape = 'u32[144,128]{1,0:T(1,128)}', space=vmem, size = 0x12000, scoped, tag = 'internal scratch']
  %s0 = inlined_call_operand.vmem [shape: s32[16,1], index: 0, kind: input, shape index: {}]
  %s1 = inlined_call_operand.hbm [shape: f32[30,1024], index: 1, kind: input, shape index: {}]
  %s2 = inlined_call_operand.hbm [shape: f32[16,1024], index: 2, kind: output, shape index: {}]
  %s3 = sld [smem:[#allocation0]]
  $region45: #{tpu_custom_call.1} parent=0
    _
  %s5 = ssub.s32 1, %s3
  %s6 = scalar_select 0, %s5, %s3
  $region1: #{tpu_custom_call.1} parent=0
    #allocation2 [shape = 'u8[131072]{0}', space=vmem, size = 0x20000, scoped, tag = 'input window, operand 1, single buffered']
    #allocation3 [shape = 's32[2]{0}', space=sflag, size = 0x8, scoped, tag = 'scoped memory for tpu_custom_call.1']
    #allocation4 [shape = 's32[2]{0}', space=sflag, size = 0x8, scoped, tag = 'scoped memory for tpu_custom_call.1']
    #allocation5 [shape = 'u8[65536]{0}', space=vmem, size = 0x10000, scoped, tag = 'output window, operand 0']
    %7 = vsyncpa [#allocation3], 0
    %8 = vsyncpa [#allocation4], 0
    %s9 = scalar_lea.sflag [#allocation4], 1
    %10 = vsyncpa %s9, 0
    loop: start=0, step=1, limit=4
    $region2: #{tpu_custom_call.1} parent=1 // loop_pre_header
      _
    $region3: #{tpu_custom_call.1} parent=1 // loop_header
      %s12 = sphi 0, %s16
      %p13 = scmp.ge.s32.totalorder %s12, 4
      %s22 = sphi 0, %s24
      %s25 = sphi 0, %s22
      %s26 = sphi 0, %s25
      %s42 = sphi 0, %s26
      %s46 = sphi 0, %s46
      %s48 = sphi 0, %s46
      %s49 = sphi 0, %s48
      %s63 = sphi 0, %s49
      %s69 = sphi 0, %s71
      %s72 = sphi 0, %s69
      %s73 = sphi 0, %s72
      %s89 = sphi 0, %s73
    $region4: #{tpu_custom_call.1} parent=1 // loop_header_branch
      %15 = sbr.rel (%p13) target = $region8
    $region5: #{tpu_custom_call.1} parent=1 // loop_body
      %s17 = ssub.s32 %s12, 1
      %s18 = ssub.s32 %s12, 2
      %s19 = sadd.s32 %s12, 1
      %s20 = ssub.s32 %s12, %s19
      %p21 = scmp.eq.s32.totalorder %s20, 0
      %s23 = sadd.s32 %s22, 1
      %s24 = scalar_select %p21, %s22, %s23
      %p27 = pneg %p21
      %p28 = scmp.eq.s32.totalorder %s12, 1
      %p29 = por %p27, %p28
      %p30 = scmp.ne.s32.totalorder %s22, %s25
      %p31 = scmp.eq.s32.totalorder %s12, 0
      %p32 = por %p30, %p31
      %p33 = scmp.ne.s32.totalorder %s22, %s25
      %p34 = scmp.eq.s32.totalorder %s17, 1
      %p35 = por %p33, %p34
      %p36 = scmp.ne.s32.totalorder %s25, %s26
      %p37 = scmp.eq.s32.totalorder %s17, 0
      %p38 = por %p36, %p37
      %p39 = scmp.ne.s32.totalorder %s25, %s26
      %p40 = scmp.eq.s32.totalorder %s18, 1
      %p41 = por %p39, %p40
      %p43 = scmp.ne.s32.totalorder %s26, %s42
      %p44 = scmp.eq.s32.totalorder %s18, 0
      %p45 = por %p43, %p44
      %s47 = sadd.s32 %s46, 1
      %p50 = scmp.eq.s32.totalorder %s12, 1
      %p51 = scmp.ne.s32.totalorder %s46, %s48
      %p52 = scmp.eq.s32.totalorder %s12, 0
      %p53 = por %p51, %p52
      %p54 = scmp.ne.s32.totalorder %s46, %s48
      %p55 = scmp.eq.s32.totalorder %s17, 1
      %p56 = por %p54, %p55
      %p57 = scmp.ne.s32.totalorder %s48, %s49
      %p58 = scmp.eq.s32.totalorder %s17, 0
      %p59 = por %p57, %p58
      %p60 = scmp.ne.s32.totalorder %s48, %s49
      %p61 = scmp.eq.s32.totalorder %s18, 1
      %p62 = por %p60, %p61
      %p64 = scmp.ne.s32.totalorder %s49, %s63
      %p65 = scmp.eq.s32.totalorder %s18, 0
      %p66 = por %p64, %p65
      %s67 = ssub.s32 %s12, %s19
      %p68 = scmp.eq.s32.totalorder %s67, 0
      %s70 = sadd.s32 %s69, 1
      %s71 = scalar_select %p68, %s69, %s70
      %p74 = pneg %p68
      %p75 = scmp.eq.s32.totalorder %s12, 1
      %p76 = por %p74, %p75
      %p77 = scmp.ne.s32.totalorder %s69, %s72
      %p78 = scmp.eq.s32.totalorder %s12, 0
      %p79 = por %p77, %p78
      %p80 = scmp.ne.s32.totalorder %s69, %s72
      %p81 = scmp.eq.s32.totalorder %s17, 1
      %p82 = por %p80, %p81
      %p83 = scmp.ne.s32.totalorder %s72, %s73
      %p84 = scmp.eq.s32.totalorder %s17, 0
      %p85 = por %p83, %p84
      %p86 = scmp.ne.s32.totalorder %s72, %s73
      %p87 = scmp.eq.s32.totalorder %s18, 1
      %p88 = por %p86, %p87
      %p90 = scmp.ne.s32.totalorder %s73, %s89
      %p91 = scmp.eq.s32.totalorder %s18, 0
      %p92 = por %p90, %p91
      %p93 = scmp.le.s32.totalorder 1, %s12
      %p94 = scmp.lt.s32.totalorder %s12, 3
      %p95 = pnand %p93, %p94
      %p96 = pneg %p95
      // Predicated region
      $region9: #{tpu_custom_call.1} parent=5 // pred_check
        _
      $region10: #{tpu_custom_call.1} parent=5 // pred_check_branch
        %98 = sbr.rel (%p95) target = $region12
      $region11: #{tpu_custom_call.1} parent=5 // pred_region
        %s99 = ssub.s32 %s12, 1
        // Predicated region
        $region13: #{tpu_custom_call.1} parent=11 // pred_check
          %p100 = pneg %p59
        $region14: #{tpu_custom_call.1} parent=11 // pred_check_branch
          %102 = sbr.rel (%p100) target = $region16
        $region15: #{tpu_custom_call.1} parent=11 // pred_region
          %s104 = ssub.s32 4096, 4096
          %105 = vsyncadd [#allocation3], %s104
          %s106 = sshll.u32 [#allocation2], 4
          %s107 = int_to_ptr.vmem [resolvable:$true] %s106
          %112 = dma.hbm_to_vmem [thread:$0]  %s1, 4096, %s107, [#allocation3], 1024, 1024, 64
        $region16: #{tpu_custom_call.1} parent=11 // pred_fallthru
          _
      $region12: #{tpu_custom_call.1} parent=5 // pred_fallthru
        _
      %p113 = scmp.lt.s32.totalorder %s12, 2
      // Predicated region
      $region17: #{tpu_custom_call.1} parent=5 // pred_check
        %p114 = pneg %p113
      $region18: #{tpu_custom_call.1} parent=5 // pred_check_branch
        %116 = sbr.rel (%p114) target = $region20
      $region19: #{tpu_custom_call.1} parent=5 // pred_region
        // Predicated region
        $region21: #{tpu_custom_call.1} parent=19 // pred_check
          %p117 = pneg %p32
        $region22: #{tpu_custom_call.1} parent=19 // pred_check_branch
          %119 = sbr.rel (%p117) target = $region24
        $region23: #{tpu_custom_call.1} parent=19 // pred_region
          %p120 = scmp.lt.s32.totalorder %s12, 1
          %s121 = scalar_select %p120, %s12, 1
          %s122 = smul.addr %s121, 8
          %s123 = scalar_lea.vmem %s0, %s122
        $region24: #{tpu_custom_call.1} parent=19 // pred_fallthru
          _
      $region20: #{tpu_custom_call.1} parent=5 // pred_fallthru
        _
      %p124 = scmp.le.s32.totalorder 1, %s12
      %p125 = scmp.lt.s32.totalorder %s12, 3
      %p126 = pnand %p124, %p125
      %p127 = pneg %p126
      // Predicated region
      $region25: #{tpu_custom_call.1} parent=5 // pred_check
        _
      $region26: #{tpu_custom_call.1} parent=5 // pred_check_branch
        %129 = sbr.rel (%p126) target = $region28
      $region27: #{tpu_custom_call.1} parent=5 // pred_region
        %s130 = ssub.s32 %s12, 1
        // Predicated region
        $region29: #{tpu_custom_call.1} parent=27 // pred_check
          %p131 = pneg %p59
        $region30: #{tpu_custom_call.1} parent=27 // pred_check_branch
          %133 = sbr.rel (%p131) target = $region32
        $region31: #{tpu_custom_call.1} parent=27 // pred_region
          %134 = dma.done [#allocation3], 4096
        $region32: #{tpu_custom_call.1} parent=27 // pred_fallthru
          _
        %p135 = scmp.lt.s32.totalorder %s17, 1
        %s136 = scalar_select %p135, %s17, 1
        %s137 = smul.addr %s136, 8
        %s138 = scalar_lea.vmem %s0, %s137
        %p139 = pneg %p38
        %p140 = pneg %p35
        %p141 = pneg %p59
        %p142 = pneg %p56
        %p143 = pneg %p85
        %p144 = pneg %p82
        %s145 = sand.u32 %s72, 1
        %s146 = scalar_lea.sflag [#allocation4], %s145
        %s147 = sand.u32 %s72, 1
        %s148 = smul.addr %s147, 64
        %s149 = scalar_lea.vmem [#allocation5], %s148
        %p150 = scmp.lt.s32.totalorder %s17, 1
        %s151 = scalar_select %p150, %s17, 1
        %s152 = smul.addr %s151, 8
        %s153 = scalar_lea.vmem %s0, %s152
        %v154 = vld [vmem:[%s153] sm:$0xff]
        %v155 = vlaneseq
        %v156 = vand.u32 %v155, 127
        %157 = vset.pattern.permute.xlu0 0
        %158 = vperm.xlu0 %157, %v154
        %v159 = vpop.permute.xlu0 %158
        %vm160 = vcmp.eq.s32.totalorder %v156, %v159
        %v161 = vsel %vm160, 1, 0
        %v162 = vcvt.s32.f32 %v161
        %v163 = vld [vmem:[#allocation2] sm:$0xff]
        %v164 = vld [vmem:[#allocation2 + $0x8] sm:$0xff]
        %v165 = vld [vmem:[#allocation2 + $0x10] sm:$0xff]
        %v166 = vld [vmem:[#allocation2 + $0x18] sm:$0xff]
        %v167 = vld [vmem:[#allocation2 + $0x20] sm:$0xff]
        %v168 = vld [vmem:[#allocation2 + $0x28] sm:$0xff]
        %v169 = vld [vmem:[#allocation2 + $0x30] sm:$0xff]
        %v170 = vld [vmem:[#allocation2 + $0x38] sm:$0xff]
        %v171 = vld [vmem:[#allocation2 + $0x40] sm:$0xff]
        %v172 = vld [vmem:[#allocation2 + $0x48] sm:$0xff]
        %v173 = vld [vmem:[#allocation2 + $0x50] sm:$0xff]
        %v174 = vld [vmem:[#allocation2 + $0x58] sm:$0xff]
        %v175 = vld [vmem:[#allocation2 + $0x60] sm:$0xff]
        %v176 = vld [vmem:[#allocation2 + $0x68] sm:$0xff]
        %v177 = vld [vmem:[#allocation2 + $0x70] sm:$0xff]
        %v178 = vld [vmem:[#allocation2 + $0x78] sm:$0xff]
        %v179 = vld [vmem:[#allocation2 + $0x80] sm:$0xff]
        %v180 = vld [vmem:[#allocation2 + $0x88] sm:$0xff]
        %v181 = vld [vmem:[#allocation2 + $0x90] sm:$0xff]
        %v182 = vld [vmem:[#allocation2 + $0x98] sm:$0xff]
        %v183 = vld [vmem:[#allocation2 + $0xa0] sm:$0xff]
        %v184 = vld [vmem:[#allocation2 + $0xa8] sm:$0xff]
        %v185 = vld [vmem:[#allocation2 + $0xb0] sm:$0xff]
        %v186 = vld [vmem:[#allocation2 + $0xb8] sm:$0xff]
        %v187 = vld [vmem:[#allocation2 + $0xc0] sm:$0x3f]
        %v188 = vld [vmem:[#allocation2 + $0xc8] sm:$0x3f]
        %v189 = vld [vmem:[#allocation2 + $0xd0] sm:$0x3f]
        %v190 = vld [vmem:[#allocation2 + $0xd8] sm:$0x3f]
        %v191 = vld [vmem:[#allocation2 + $0xe0] sm:$0x3f]
        %v192 = vld [vmem:[#allocation2 + $0xe8] sm:$0x3f]
        %v193 = vld [vmem:[#allocation2 + $0xf0] sm:$0x3f]
        %v194 = vld [vmem:[#allocation2 + $0xf8] sm:$0x3f]
        %vm195 = vcmask 244736
        %v197 = vsel %vm195, %v162, 0
        %vm199 = vcmask 1045504
        %v201 = vsel %vm199, %v187, 0
        %v204 = vsel %vm199, %v188, 0
        %v207 = vsel %vm199, %v189, 0
        %v210 = vsel %vm199, %v190, 0
        %v213 = vsel %vm199, %v191, 0
        %v216 = vsel %vm199, %v192, 0
        %v219 = vsel %vm199, %v193, 0
        %v222 = vsel %vm199, %v194, 0
        %224 = vmatprep.subr.mxu0 0.0
        %225 = vmatpush1.msra.mxu0 0.0
        %226 = vmatprep.subr.mxu0 0.0
        %227 = vmatpush1.msra.mxu0 0.0
        %228 = vmatprep.subr.mxu0 0.0
        %229 = vmatpush1.msra.mxu0 0.0
        %230 = vmatprep.subr.mxu0 0.0
        %231 = vmatpush1.msra.mxu0 0.0
        %232 = vmatprep.subr.mxu0 0.0
        %233 = vmatpush1.msra.mxu0 0.0
        %234 = vmatprep.subr.mxu0 0.0
        %235 = vmatpush1.msra.mxu0 0.0
        %236 = vmatprep.subr.mxu0 0.0
        %237 = vmatpush1.msra.mxu0 0.0
        %238 = vmatprep.subr.mxu0 0.0
        %239 = vmatpush1.msra.mxu0 0.0
        %240 = vmatprep.subr.mxu0 0.0
        %241 = vmatpush1.msra.mxu0 0.0
        %242 = vmatprep.subr.mxu0 0.0
        %243 = vmatpush1.msra.mxu0 0.0
        %244 = vmatprep.subr.mxu0 0.0
        %245 = vmatpush1.msra.mxu0 0.0
        %246 = vmatprep.subr.mxu0 0.0
        %247 = vmatpush1.msra.mxu0 0.0
        %248 = vmatprep.subr.mxu0 %v204
        %249 = vmatpush1.msra.mxu0 %v201
        %250 = vmatprep.subr.mxu0 %v180
        %251 = vmatpush1.msra.mxu0 %v179
        %252 = vmatprep.subr.mxu0 %v172
        %253 = vmatpush1.msra.mxu0 %v171
        %254 = vmatprep.subr.mxu0 %v164
        %255 = vmatpush1.msra.mxu0 %v163
        %256 = vmatprep.subr.mxu0 0.0
        %257 = vmatpush2.msra.mxu0 0.0
        %258 = vmatprep.subr.mxu0 0.0
        %259 = vmatpush2.msra.mxu0 0.0
        %260 = vmatprep.subr.mxu0 0.0
        %261 = vmatpush2.msra.mxu0 0.0
        %262 = vmatprep.subr.mxu0 0.0
        %263 = vmatpush2.msra.mxu0 0.0
        %264 = vmatprep.subr.mxu0 0.0
        %265 = vmatpush2.msra.mxu0 0.0
        %266 = vmatprep.subr.mxu0 0.0
        %267 = vmatpush2.msra.mxu0 0.0
        %268 = vmatprep.subr.mxu0 0.0
        %269 = vmatpush2.msra.mxu0 0.0
        %270 = vmatprep.subr.mxu0 0.0
        %271 = vmatpush2.msra.mxu0 0.0
        %272 = vmatprep.subr.mxu0 0.0
        %273 = vmatpush2.msra.mxu0 0.0
        %274 = vmatprep.subr.mxu0 0.0
        %275 = vmatpush2.msra.mxu0 0.0
        %276 = vmatprep.subr.mxu0 0.0
        %277 = vmatpush2.msra.mxu0 0.0
        %278 = vmatprep.subr.mxu0 0.0
        %279 = vmatpush2.msra.mxu0 0.0
        %280 = vmatprep.subr.mxu0 0.0
        %281 = vmatpush2.msra.mxu0 0.0
        %282 = vmatprep.subr.mxu0 0.0
        %283 = vmatpush2.msra.mxu0 0.0
        %284 = vmatprep.subr.mxu0 0.0
        %285 = vmatpush2.msra.mxu0 0.0
        %286 = vmatprep.subr.mxu0 0.0
        %287 = vmatpush2.msra.mxu0 0.0
        %288 = vmatprep.mubr.f32.mxu0 0.0
        %289 = vmatmul.mubr.f32.gmra.mxu0 %v197
        %v290 = vpop.f32.mrf.mxu0
        %v291 = vadd.f32 0.0, %v290
        %v292 = vpop.f32.mrf.mxu0
        %v293 = vadd.f32 0.0, %v292
        %294 = vdwg.mxu0
        %295 = vmatprep.subr.mxu0 0.0
        %296 = vmatpush1.msra.mxu0 0.0
        %297 = vmatprep.subr.mxu0 0.0
        %298 = vmatpush1.msra.mxu0 0.0
        %299 = vmatprep.subr.mxu0 0.0
        %300 = vmatpush1.msra.mxu0 0.0
        %301 = vmatprep.subr.mxu0 0.0
        %302 = vmatpush1.msra.mxu0 0.0
        %303 = vmatprep.subr.mxu0 0.0
        %304 = vmatpush1.msra.mxu0 0.0
        %305 = vmatprep.subr.mxu0 0.0
        %306 = vmatpush1.msra.mxu0 0.0
        %307 = vmatprep.subr.mxu0 0.0
        %308 = vmatpush1.msra.mxu0 0.0
        %309 = vmatprep.subr.mxu0 0.0
        %310 = vmatpush1.msra.mxu0 0.0
        %311 = vmatprep.subr.mxu0 0.0
        %312 = vmatpush1.msra.mxu0 0.0
        %313 = vmatprep.subr.mxu0 0.0
        %314 = vmatpush1.msra.mxu0 0.0
        %315 = vmatprep.subr.mxu0 0.0
        %316 = vmatpush1.msra.mxu0 0.0
        %317 = vmatprep.subr.mxu0 0.0
        %318 = vmatpush1.msra.mxu0 0.0
        %319 = vmatprep.subr.mxu0 %v210
        %320 = vmatpush1.msra.mxu0 %v207
        %321 = vmatprep.subr.mxu0 %v182
        %322 = vmatpush1.msra.mxu0 %v181
        %323 = vmatprep.subr.mxu0 %v174
        %324 = vmatpush1.msra.mxu0 %v173
        %325 = vmatprep.subr.mxu0 %v166
        %326 = vmatpush1.msra.mxu0 %v165
        %327 = vmatprep.subr.mxu0 0.0
        %328 = vmatpush2.msra.mxu0 0.0
        %329 = vmatprep.subr.mxu0 0.0
        %330 = vmatpush2.msra.mxu0 0.0
        %331 = vmatprep.subr.mxu0 0.0
        %332 = vmatpush2.msra.mxu0 0.0
        %333 = vmatprep.subr.mxu0 0.0
        %334 = vmatpush2.msra.mxu0 0.0
        %335 = vmatprep.subr.mxu0 0.0
        %336 = vmatpush2.msra.mxu0 0.0
        %337 = vmatprep.subr.mxu0 0.0
        %338 = vmatpush2.msra.mxu0 0.0
        %339 = vmatprep.subr.mxu0 0.0
        %340 = vmatpush2.msra.mxu0 0.0
        %341 = vmatprep.subr.mxu0 0.0
        %342 = vmatpush2.msra.mxu0 0.0
        %343 = vmatprep.subr.mxu0 0.0
        %344 = vmatpush2.msra.mxu0 0.0
        %345 = vmatprep.subr.mxu0 0.0
        %346 = vmatpush2.msra.mxu0 0.0
        %347 = vmatprep.subr.mxu0 0.0
        %348 = vmatpush2.msra.mxu0 0.0
        %349 = vmatprep.subr.mxu0 0.0
        %350 = vmatpush2.msra.mxu0 0.0
        %351 = vmatprep.subr.mxu0 0.0
        %352 = vmatpush2.msra.mxu0 0.0
        %353 = vmatprep.subr.mxu0 0.0
        %354 = vmatpush2.msra.mxu0 0.0
        %355 = vmatprep.subr.mxu0 0.0
        %356 = vmatpush2.msra.mxu0 0.0
        %357 = vmatprep.subr.mxu0 0.0
        %358 = vmatpush2.msra.mxu0 0.0
        %359 = vmatprep.mubr.f32.mxu0 0.0
        %360 = vmatmul.mubr.f32.gmra.mxu0 %v197
        %v361 = vpop.f32.mrf.mxu0
        %v362 = vadd.f32 0.0, %v361
        %v363 = vpop.f32.mrf.mxu0
        %v364 = vadd.f32 0.0, %v363
        %365 = vdwg.mxu0
        %366 = vmatprep.subr.mxu0 0.0
        %367 = vmatpush1.msra.mxu0 0.0
        %368 = vmatprep.subr.mxu0 0.0
        %369 = vmatpush1.msra.mxu0 0.0
        %370 = vmatprep.subr.mxu0 0.0
        %371 = vmatpush1.msra.mxu0 0.0
        %372 = vmatprep.subr.mxu0 0.0
        %373 = vmatpush1.msra.mxu0 0.0
        %374 = vmatprep.subr.mxu0 0.0
        %375 = vmatpush1.msra.mxu0 0.0
        %376 = vmatprep.subr.mxu0 0.0
        %377 = vmatpush1.msra.mxu0 0.0
        %378 = vmatprep.subr.mxu0 0.0
        %379 = vmatpush1.msra.mxu0 0.0
        %380 = vmatprep.subr.mxu0 0.0
        %381 = vmatpush1.msra.mxu0 0.0
        %382 = vmatprep.subr.mxu0 0.0
        %383 = vmatpush1.msra.mxu0 0.0
        %384 = vmatprep.subr.mxu0 0.0
        %385 = vmatpush1.msra.mxu0 0.0
        %386 = vmatprep.subr.mxu0 0.0
        %387 = vmatpush1.msra.mxu0 0.0
        %388 = vmatprep.subr.mxu0 0.0
        %389 = vmatpush1.msra.mxu0 0.0
        %390 = vmatprep.subr.mxu0 %v216
        %391 = vmatpush1.msra.mxu0 %v213
        %392 = vmatprep.subr.mxu0 %v184
        %393 = vmatpush1.msra.mxu0 %v183
        %394 = vmatprep.subr.mxu0 %v176
        %395 = vmatpush1.msra.mxu0 %v175
        %396 = vmatprep.subr.mxu0 %v168
        %397 = vmatpush1.msra.mxu0 %v167
        %398 = vmatprep.subr.mxu0 0.0
        %399 = vmatpush2.msra.mxu0 0.0
        %400 = vmatprep.subr.mxu0 0.0
        %401 = vmatpush2.msra.mxu0 0.0
        %402 = vmatprep.subr.mxu0 0.0
        %403 = vmatpush2.msra.mxu0 0.0
        %404 = vmatprep.subr.mxu0 0.0
        %405 = vmatpush2.msra.mxu0 0.0
        %406 = vmatprep.subr.mxu0 0.0
        %407 = vmatpush2.msra.mxu0 0.0
        %408 = vmatprep.subr.mxu0 0.0
        %409 = vmatpush2.msra.mxu0 0.0
        %410 = vmatprep.subr.mxu0 0.0
        %411 = vmatpush2.msra.mxu0 0.0
        %412 = vmatprep.subr.mxu0 0.0
        %413 = vmatpush2.msra.mxu0 0.0
        %414 = vmatprep.subr.mxu0 0.0
        %415 = vmatpush2.msra.mxu0 0.0
        %416 = vmatprep.subr.mxu0 0.0
        %417 = vmatpush2.msra.mxu0 0.0
        %418 = vmatprep.subr.mxu0 0.0
        %419 = vmatpush2.msra.mxu0 0.0
        %420 = vmatprep.subr.mxu0 0.0
        %421 = vmatpush2.msra.mxu0 0.0
        %422 = vmatprep.subr.mxu0 0.0
        %423 = vmatpush2.msra.mxu0 0.0
        %424 = vmatprep.subr.mxu0 0.0
        %425 = vmatpush2.msra.mxu0 0.0
        %426 = vmatprep.subr.mxu0 0.0
        %427 = vmatpush2.msra.mxu0 0.0
        %428 = vmatprep.subr.mxu0 0.0
        %429 = vmatpush2.msra.mxu0 0.0
        %430 = vmatprep.mubr.f32.mxu0 0.0
        %431 = vmatmul.mubr.f32.gmra.mxu0 %v197
        %v432 = vpop.f32.mrf.mxu0
        %v433 = vadd.f32 0.0, %v432
        %v434 = vpop.f32.mrf.mxu0
        %v435 = vadd.f32 0.0, %v434
        %436 = vdwg.mxu0
        %437 = vmatprep.subr.mxu0 0.0
        %438 = vmatpush1.msra.mxu0 0.0
        %439 = vmatprep.subr.mxu0 0.0
        %440 = vmatpush1.msra.mxu0 0.0
        %441 = vmatprep.subr.mxu0 0.0
        %442 = vmatpush1.msra.mxu0 0.0
        %443 = vmatprep.subr.mxu0 0.0
        %444 = vmatpush1.msra.mxu0 0.0
        %445 = vmatprep.subr.mxu0 0.0
        %446 = vmatpush1.msra.mxu0 0.0
        %447 = vmatprep.subr.mxu0 0.0
        %448 = vmatpush1.msra.mxu0 0.0
        %449 = vmatprep.subr.mxu0 0.0
        %450 = vmatpush1.msra.mxu0 0.0
        %451 = vmatprep.subr.mxu0 0.0
        %452 = vmatpush1.msra.mxu0 0.0
        %453 = vmatprep.subr.mxu0 0.0
        %454 = vmatpush1.msra.mxu0 0.0
        %455 = vmatprep.subr.mxu0 0.0
        %456 = vmatpush1.msra.mxu0 0.0
        %457 = vmatprep.subr.mxu0 0.0
        %458 = vmatpush1.msra.mxu0 0.0
        %459 = vmatprep.subr.mxu0 0.0
        %460 = vmatpush1.msra.mxu0 0.0
        %461 = vmatprep.subr.mxu0 %v222
        %462 = vmatpush1.msra.mxu0 %v219
        %463 = vmatprep.subr.mxu0 %v186
        %464 = vmatpush1.msra.mxu0 %v185
        %465 = vmatprep.subr.mxu0 %v178
        %466 = vmatpush1.msra.mxu0 %v177
        %467 = vmatprep.subr.mxu0 %v170
        %468 = vmatpush1.msra.mxu0 %v169
        %469 = vmatprep.subr.mxu0 0.0
        %470 = vmatpush2.msra.mxu0 0.0
        %471 = vmatprep.subr.mxu0 0.0
        %472 = vmatpush2.msra.mxu0 0.0
        %473 = vmatprep.subr.mxu0 0.0
        %474 = vmatpush2.msra.mxu0 0.0
        %475 = vmatprep.subr.mxu0 0.0
        %476 = vmatpush2.msra.mxu0 0.0
        %477 = vmatprep.subr.mxu0 0.0
        %478 = vmatpush2.msra.mxu0 0.0
        %479 = vmatprep.subr.mxu0 0.0
        %480 = vmatpush2.msra.mxu0 0.0
        %481 = vmatprep.subr.mxu0 0.0
        %482 = vmatpush2.msra.mxu0 0.0
        %483 = vmatprep.subr.mxu0 0.0
        %484 = vmatpush2.msra.mxu0 0.0
        %485 = vmatprep.subr.mxu0 0.0
        %486 = vmatpush2.msra.mxu0 0.0
        %487 = vmatprep.subr.mxu0 0.0
        %488 = vmatpush2.msra.mxu0 0.0
        %489 = vmatprep.subr.mxu0 0.0
        %490 = vmatpush2.msra.mxu0 0.0
        %491 = vmatprep.subr.mxu0 0.0
        %492 = vmatpush2.msra.mxu0 0.0
        %493 = vmatprep.subr.mxu0 0.0
        %494 = vmatpush2.msra.mxu0 0.0
        %495 = vmatprep.subr.mxu0 0.0
        %496 = vmatpush2.msra.mxu0 0.0
        %497 = vmatprep.subr.mxu0 0.0
        %498 = vmatpush2.msra.mxu0 0.0
        %499 = vmatprep.subr.mxu0 0.0
        %500 = vmatpush2.msra.mxu0 0.0
        %501 = vmatprep.mubr.f32.mxu0 0.0
        %502 = vmatmul.mubr.f32.gmra.mxu0 %v197
        %v503 = vpop.f32.mrf.mxu0
        %v504 = vadd.f32 0.0, %v503
        %v505 = vpop.f32.mrf.mxu0
        %v506 = vadd.f32 0.0, %v505
        %507 = vdwg.mxu0
        %508 = vst [vmem:[%s149] sm:$0xff] %v291
        %509 = vst [vmem:[%s149 + $0x8] sm:$0xff] %v293
        %510 = vst [vmem:[%s149 + $0x10] sm:$0xff] %v362
        %511 = vst [vmem:[%s149 + $0x18] sm:$0xff] %v364
        %512 = vst [vmem:[%s149 + $0x20] sm:$0xff] %v433
        %513 = vst [vmem:[%s149 + $0x28] sm:$0xff] %v435
        %514 = vst [vmem:[%s149 + $0x30] sm:$0xff] %v504
        %515 = vst [vmem:[%s149 + $0x38] sm:$0xff] %v506
        %s516 = sand.u32 %s72, 1
        %s517 = scalar_lea.sflag [#allocation4], %s516
        %s518 = sand.u32 %s72, 1
        %s519 = smul.addr %s518, 64
        %s520 = scalar_lea.vmem [#allocation5], %s519
        // Predicated region
        $region33: #{tpu_custom_call.1} parent=27 // pred_check
          %p521 = pneg %p82
        $region34: #{tpu_custom_call.1} parent=27 // pred_check_branch
          %523 = sbr.rel (%p521) target = $region36
        $region35: #{tpu_custom_call.1} parent=27 // pred_region
          %s525 = ssub.s32 1024, 1024
          %526 = vsyncadd %s517, %s525
          %s527 = smul.addr %s17, 8
          %s528 = smul.addr %s527, 128
          %s529 = scalar_lea.hbm %s2, %s528
          %s531 = sshll.u32 %s520, 4
          %s532 = int_to_ptr.vmem [resolvable:$true] %s531
          %534 = dma.vmem_to_hbm [thread:$0]  %s532, 1024, %s529, %s517
        $region36: #{tpu_custom_call.1} parent=27 // pred_fallthru
          _
      $region28: #{tpu_custom_call.1} parent=5 // pred_fallthru
        _
      %p535 = scmp.le.s32.totalorder 2, %s12
      // Predicated region
      $region37: #{tpu_custom_call.1} parent=5 // pred_check
        %p536 = pneg %p535
      $region38: #{tpu_custom_call.1} parent=5 // pred_check_branch
        %538 = sbr.rel (%p536) target = $region40
      $region39: #{tpu_custom_call.1} parent=5 // pred_region
        %s539 = ssub.s32 %s12, 2
        // Predicated region
        $region41: #{tpu_custom_call.1} parent=39 // pred_check
          %p540 = pneg %p88
        $region42: #{tpu_custom_call.1} parent=39 // pred_check_branch
          %542 = sbr.rel (%p540) target = $region44
        $region43: #{tpu_custom_call.1} parent=39 // pred_region
          %s543 = sand.u32 %s73, 1
          %s544 = scalar_lea.sflag [#allocation4], %s543
          %s545 = sand.u32 %s73, 1
          %s546 = smul.addr %s545, 64
          %s547 = scalar_lea.vmem [#allocation5], %s546
          %548 = dma.done %s544, 1024
        $region44: #{tpu_custom_call.1} parent=39 // pred_fallthru
          _
      $region40: #{tpu_custom_call.1} parent=5 // pred_fallthru
        _
    $region6: #{tpu_custom_call.1} parent=1 // loop_footer
      %s16 = sadd.s32 1, %s12
    $region7: #{tpu_custom_call.1} parent=1 // loop_footer_branch
      %11 = sbr.rel target = $region3
    $region8: #{tpu_custom_call.1} parent=1 // loop_exit
      _
    %549 = vsyncpa [#allocation3], 1
    %s550 = scalar_lea.sflag [#allocation3], 1
    %551 = vsyncpa %s550, 1
    %552 = vsyncpa [#allocation4], 1
    %s553 = scalar_lea.sflag [#allocation4], 1
    %554 = vsyncpa %s553, 1

</llo_original>
